<compile_context>
chip_gen: v7x
topology: tpu7x:2x2x1
jax: 0.10.0
libtpu: 0.0.40
codegen_flags: <defaults>
</compile_context>

<pallas_src>
import jax
import jax.numpy as jnp
from jax.experimental import pallas as pl
from jax.experimental.pallas import tpu as pltpu


def _autoencoder_kernel(x_ref,
                        w1, b1, w2, b2, w3t, b3,          # encoder params
                        w4, b4, w5, b5, w6, b6,           # decoder params
                        out_ref):
    """Full encoder+decoder MLP chain on one [batch_tile, D] tile in VMEM."""
    # In-kernel bf16 cast (VPU work hidden under the input DMA) replaces the
    # old wrapper-side padded/cast copy, which cost an extra HBM pass.
    x = x_ref[...].astype(jnp.bfloat16)                      # [T, D]

    # ---- encoder ----  (Dropout(p=0) is the identity and is omitted.)
    h = jnp.dot(x, w1[...], preferred_element_type=jnp.float32) + b1[...]
    h = jnp.maximum(h, 0.0)                                  # ReLU (f32) [T, 64]
    h = jnp.dot(h.astype(jnp.bfloat16), w2[...],
                preferred_element_type=jnp.float32) + b2[...]
    h = jnp.maximum(h, 0.0)                                  # ReLU (f32) [T, 32]

    # ---- 32 -> 2 bottleneck + Sigmoid, kept off the MXU (VPU mul + XLU reduce) ----
    w3v = w3t[...]                                           # [2, 32] f32 (torch layout)
    b3v = b3[...]                                            # [1, 2]  f32
    z0 = jax.nn.sigmoid(jnp.sum(h * w3v[0:1, :], axis=-1, keepdims=True)
                        + b3v[:, 0:1])                       # [T, 1]
    z1 = jax.nn.sigmoid(jnp.sum(h * w3v[1:2, :], axis=-1, keepdims=True)
                        + b3v[:, 1:2])                       # [T, 1]

    # ---- decoder ----
    # 2 -> 32 expansion: pure VPU broadcast-multiply-add (no MXU pass).
    w4v = w4[...]                                            # [2, 32] f32
    h = jnp.maximum(z0 * w4v[0:1, :] + z1 * w4v[1:2, :] + b4[...], 0.0)  # [T, 32]

    h = jnp.dot(h.astype(jnp.bfloat16), w5[...],
                preferred_element_type=jnp.float32) + b5[...]
    h = jnp.maximum(h, 0.0)                                  # ReLU   [T, 64]
    y = jnp.dot(h.astype(jnp.bfloat16), w6[...],
                preferred_element_type=jnp.float32) + b6[...]   # [T, D]
    # (last decoder ReLU was popped in the PyTorch module -> linear output)

    out_ref[...] = y.astype(out_ref.dtype)


def _round_up(n, m):
    return ((n + m - 1) // m) * m


def _vmem_budget_and_limit():
    """Generation-aware VMEM sizing (v7x has 64 MiB physical vs 128 on v5e/v6e)."""
    try:
        cap = int(pltpu.get_tpu_info().vmem_capacity_bytes)
    except Exception:  # pragma: no cover - fall back to the larger generations
        cap = 128 << 20
    if cap <= (64 << 20):
        return 12 << 20, 32 << 20   # (tile-sizing budget, scoped vmem limit cap)
    return 24 << 20, 48 << 20


def _choose_batch_tile(batch, d_lanes, vmem_budget, *, target_steps=8, max_tile=1024):
    """Pick a batch tile: fits the VMEM budget, <=1024 rows, and yields >=
    `target_steps` grid steps when the batch allows (so double-buffering has a
    steady state and v7x's two TensorCores each get several steps)."""
    if batch <= 16:
        return max(batch, 1)        # single full-array block (always legal)
    # per-row VMEM bytes: double-buffered f32 x tile + bf16 out tile + activations
    per_row = d_lanes * (2 * 4 + 2 * 2) + 2048
    vmem_cap = max(16, (vmem_budget // per_row) // 16 * 16)
    tile = min(max_tile, vmem_cap)
    want = _round_up(pl.cdiv(batch, target_steps), 16)
    return max(16, min(tile, want))


def autoencoder_forward(x, params, *, batch_tile=None, out_dtype=jnp.bfloat16):
    """x: [B, D] float32. params: dict of (w, b) with w as [in, out], b as [1, out]."""
    B, D = x.shape
    (w1, b1), (w2, b2), (w3, b3) = params["enc"]
    (w4, b4), (w5, b5), (w6, b6) = params["dec"]

    budget, limit_cap = _vmem_budget_and_limit()
    d_lanes = _round_up(max(D, 128), 128)          # lane-padded width (VMEM accounting only)
    if batch_tile is None:
        batch_tile = _choose_batch_tile(B, d_lanes, budget)
    n_tiles = pl.cdiv(B, batch_tile)               # ragged last block handled by Pallas

    # One-time cast of the tiny (<100 KB) MXU weight operands to bf16.
    w1_c = w1.astype(jnp.bfloat16)
    w2_c = w2.astype(jnp.bfloat16)
    w5_c = w5.astype(jnp.bfloat16)
    w6_c = w6.astype(jnp.bfloat16)
    w3t = w3.T.astype(jnp.float32)                 # [2, 32] for the VPU bottleneck path
    weights = [w1_c, b1, w2_c, b2, w3t, b3, w4, b4, w5_c, b5, w6_c, b6]

    def full_spec(arr):
        # Whole (tiny) weight/bias array, resident at a constant block index.
        return pl.BlockSpec(arr.shape, lambda i: (0, 0))

    x_spec = pl.BlockSpec((batch_tile, D), lambda i: (i, 0))
    out_spec = pl.BlockSpec((batch_tile, D), lambda i: (i, 0))

    out_itemsize = jnp.dtype(out_dtype).itemsize
    weight_bytes = sum(int(w.size) * w.dtype.itemsize for w in weights)
    est = (2 * batch_tile * d_lanes * 4            # x tile, f32, double-buffered
           + 2 * batch_tile * d_lanes * out_itemsize   # out tile, double-buffered
           + 2 * weight_bytes                      # resident weights
           + batch_tile * 2048)                    # in-kernel activation headroom
    vmem_limit = int(min(max(2 * est, 16 << 20), limit_cap))

    flops = 2 * B * (D * 64 + 64 * 32 + 32 * 2 + 2 * 32 + 32 * 64 + 64 * D)
    bytes_accessed = B * D * 4 + B * D * out_itemsize + weight_bytes

    out = pl.pallas_call(
        _autoencoder_kernel,
        out_shape=jax.ShapeDtypeStruct((B, D), out_dtype),
        grid_spec=pltpu.PrefetchScalarGridSpec(
            num_scalar_prefetch=0,
            grid=(n_tiles,),
            in_specs=[x_spec] + [full_spec(w) for w in weights],
            out_specs=out_spec,
        ),
        compiler_params=pltpu.CompilerParams(
            dimension_semantics=("parallel",),
            vmem_limit_bytes=vmem_limit,
        ),
        cost_estimate=pl.CostEstimate(
            flops=flops, transcendentals=2 * B, bytes_accessed=bytes_accessed),
    )(x.astype(jnp.float32), *weights)
    return out


def init_params(key, input_dim, latent_dim=2, layers=(64, 32)):
    """Deterministic PyTorch-style (Kaiming-uniform) init for each Linear layer.

    Returns weights transposed to [in, out] and biases as [1, out]."""
    dims = [input_dim] + list(layers) + [latent_dim]
    enc_layout = list(zip(dims[:-1], dims[1:]))                   # encoder (i -> j)
    dec_layout = [(j, i) for (i, j) in reversed(enc_layout)]      # decoder (reverse)

    def linear(key, fan_in, fan_out):
        kw, kb = jax.random.split(key)
        bound = 1.0 / jnp.sqrt(jnp.float32(fan_in))
        w = jax.random.uniform(kw, (fan_in, fan_out), jnp.float32, -bound, bound)
        b = jax.random.uniform(kb, (1, fan_out), jnp.float32, -bound, bound)
        return w, b

    keys = jax.random.split(key, len(enc_layout) + len(dec_layout))
    enc = [linear(keys[k], i, j) for k, (i, j) in enumerate(enc_layout)]
    dec = [linear(keys[len(enc_layout) + k], i, j)
           for k, (i, j) in enumerate(dec_layout)]
    return {"enc": enc, "dec": dec}


def autoencoder_ref(x, params):
    """Pure-JAX exact-f32 reference for correctness checking."""
    (w1, b1), (w2, b2), (w3, b3) = params["enc"]
    (w4, b4), (w5, b5), (w6, b6) = params["dec"]
    h = jnp.maximum(x @ w1 + b1, 0.0)
    h = jnp.maximum(h @ w2 + b2, 0.0)
    z = jax.nn.sigmoid(h @ w3 + b3)
    h = jnp.maximum(z @ w4 + b4, 0.0)
    h = jnp.maximum(h @ w5 + b5, 0.0)
    return h @ w6 + b6


if __name__ == "__main__":
    key = jax.random.PRNGKey(0)
    k_params, k_x, k_rag, k_big = jax.random.split(key, 4)

    input_dim = 64
    params = init_params(k_params, input_dim, latent_dim=2, layers=(64, 32))

    def check(xq, name):
        y = jax.block_until_ready(autoencoder_forward(xq, params))
        y_ref = autoencoder_ref(xq, params)
        assert y.shape == xq.shape, name
        # bf16 MXU inputs + bf16 output store -> relax tolerance vs exact f32 ref.
        assert jnp.allclose(y.astype(jnp.float32), y_ref, atol=5e-2, rtol=5e-2), (
            f"mismatch vs reference: {name}")

    # Small run: single full-array block.
    x = jax.random.normal(k_x, (16, input_dim), jnp.float32)
    check(x, "small")

    # Ragged batch: 3 grid steps of 16 rows, last block half-valid (no batch pad).
    x_rag = jax.random.normal(k_rag, (40, input_dim), jnp.float32)
    check(x_rag, "ragged")

    # Larger batch: 8 parallel grid steps of 256 rows (pipelined / 2-TC split).
    x_big = jax.random.normal(k_big, (2048, input_dim), jnp.float32)
    check(x_big, "big")

    print("KERNEL_OK")
</pallas_src>

<mosaic_0001>
module attributes {stable_mosaic.version = 11 : i64} {
  func.func @_autoencoder_kernel(%arg0: i32, %arg1: memref<16x64xf32, #tpu.memory_space<vmem>>, %arg2: memref<64x64xbf16, #tpu.memory_space<vmem>>, %arg3: memref<1x64xf32, #tpu.memory_space<vmem>>, %arg4: memref<64x32xbf16, #tpu.memory_space<vmem>>, %arg5: memref<1x32xf32, #tpu.memory_space<vmem>>, %arg6: memref<2x32xf32, #tpu.memory_space<vmem>>, %arg7: memref<1x2xf32, #tpu.memory_space<vmem>>, %arg8: memref<2x32xf32, #tpu.memory_space<vmem>>, %arg9: memref<1x32xf32, #tpu.memory_space<vmem>>, %arg10: memref<32x64xbf16, #tpu.memory_space<vmem>>, %arg11: memref<1x64xf32, #tpu.memory_space<vmem>>, %arg12: memref<64x64xbf16, #tpu.memory_space<vmem>>, %arg13: memref<1x64xf32, #tpu.memory_space<vmem>>, %arg14: memref<16x64xbf16, #tpu.memory_space<vmem>>) attributes {dimension_semantics = [#tpu.dimension_semantics<parallel>], iteration_bounds = array<i64: 1>, scalar_prefetch = 0 : i64, scratch_operands = 0 : i64, tpu.core_type = #tpu.core_type<tc>, window_params = [{transform_indices = @transform_0, window_bounds = array<i64: 16, 64>}, {pipeline_mode = #tpu.pipeline_mode<synchronous>, transform_indices = @transform_1, window_bounds = array<i64: 64, 64>}, {pipeline_mode = #tpu.pipeline_mode<synchronous>, transform_indices = @transform_2, window_bounds = array<i64: 1, 64>}, {pipeline_mode = #tpu.pipeline_mode<synchronous>, transform_indices = @transform_3, window_bounds = array<i64: 64, 32>}, {pipeline_mode = #tpu.pipeline_mode<synchronous>, transform_indices = @transform_4, window_bounds = array<i64: 1, 32>}, {pipeline_mode = #tpu.pipeline_mode<synchronous>, transform_indices = @transform_5, window_bounds = array<i64: 2, 32>}, {pipeline_mode = #tpu.pipeline_mode<synchronous>, transform_indices = @transform_6, window_bounds = array<i64: 1, 2>}, {pipeline_mode = #tpu.pipeline_mode<synchronous>, transform_indices = @transform_7, window_bounds = array<i64: 2, 32>}, {pipeline_mode = #tpu.pipeline_mode<synchronous>, transform_indices = @transform_8, window_bounds = array<i64: 1, 32>}, {pipeline_mode = #tpu.pipeline_mode<synchronous>, transform_indices = @transform_9, window_bounds = array<i64: 32, 64>}, {pipeline_mode = #tpu.pipeline_mode<synchronous>, transform_indices = @transform_10, window_bounds = array<i64: 1, 64>}, {pipeline_mode = #tpu.pipeline_mode<synchronous>, transform_indices = @transform_11, window_bounds = array<i64: 64, 64>}, {pipeline_mode = #tpu.pipeline_mode<synchronous>, transform_indices = @transform_12, window_bounds = array<i64: 1, 64>}, {transform_indices = @transform_13, window_bounds = array<i64: 16, 64>}]} {
    %c0 = arith.constant 0 : index
    %c0_0 = arith.constant 0 : index
    %0 = vector.load %arg1[%c0, %c0_0] : memref<16x64xf32, #tpu.memory_space<vmem>>, vector<16x64xf32>
    %1 = arith.truncf %0 : vector<16x64xf32> to vector<16x64xbf16>
    %c0_1 = arith.constant 0 : index
    %c0_2 = arith.constant 0 : index
    %2 = vector.load %arg2[%c0_1, %c0_2] : memref<64x64xbf16, #tpu.memory_space<vmem>>, vector<64x64xbf16>
    %cst = arith.constant dense<0.000000e+00> : vector<16x64xf32>
    %3 = tpu.matmul %1, %2, %cst {dimension_numbers = #tpu.dot_dimension_numbers<[1], [0], [0], [1], [0, 0, 1, 1], [], []>} : vector<16x64xbf16>, vector<64x64xbf16>, vector<16x64xf32> -> vector<16x64xf32>
    %c0_3 = arith.constant 0 : index
    %c0_4 = arith.constant 0 : index
    %4 = vector.load %arg3[%c0_3, %c0_4] : memref<1x64xf32, #tpu.memory_space<vmem>>, vector<1x64xf32>
    %5 = vector.broadcast %4 : vector<1x64xf32> to vector<16x64xf32>
    %6 = arith.addf %3, %5 : vector<16x64xf32>
    %cst_5 = arith.constant 0.000000e+00 : f32
    %7 = vector.broadcast %cst_5 : f32 to vector<16x64xf32>
    %8 = arith.maximumf %6, %7 : vector<16x64xf32>
    %9 = arith.truncf %8 : vector<16x64xf32> to vector<16x64xbf16>
    %c0_6 = arith.constant 0 : index
    %c0_7 = arith.constant 0 : index
    %10 = vector.load %arg4[%c0_6, %c0_7] : memref<64x32xbf16, #tpu.memory_space<vmem>>, vector<64x32xbf16>
    %cst_8 = arith.constant dense<0.000000e+00> : vector<16x32xf32>
    %11 = tpu.matmul %9, %10, %cst_8 {dimension_numbers = #tpu.dot_dimension_numbers<[1], [0], [0], [1], [0, 0, 1, 1], [], []>} : vector<16x64xbf16>, vector<64x32xbf16>, vector<16x32xf32> -> vector<16x32xf32>
    %c0_9 = arith.constant 0 : index
    %c0_10 = arith.constant 0 : index
    %12 = vector.load %arg5[%c0_9, %c0_10] : memref<1x32xf32, #tpu.memory_space<vmem>>, vector<1x32xf32>
    %13 = vector.broadcast %12 : vector<1x32xf32> to vector<16x32xf32>
    %14 = arith.addf %11, %13 : vector<16x32xf32>
    %cst_11 = arith.constant 0.000000e+00 : f32
    %15 = vector.broadcast %cst_11 : f32 to vector<16x32xf32>
    %16 = arith.maximumf %14, %15 : vector<16x32xf32>
    %c0_12 = arith.constant 0 : index
    %c0_13 = arith.constant 0 : index
    %17 = vector.load %arg6[%c0_12, %c0_13] : memref<2x32xf32, #tpu.memory_space<vmem>>, vector<2x32xf32>
    %c0_14 = arith.constant 0 : index
    %c0_15 = arith.constant 0 : index
    %18 = vector.load %arg7[%c0_14, %c0_15] : memref<1x2xf32, #tpu.memory_space<vmem>>, vector<1x2xf32>
    %19 = vector.extract_strided_slice %17 {offsets = [0, 0], sizes = [1, 32], strides = [1, 1]} : vector<2x32xf32> to vector<1x32xf32>
    %20 = vector.broadcast %19 : vector<1x32xf32> to vector<16x32xf32>
    %21 = arith.mulf %16, %20 : vector<16x32xf32>
    %cst_16 = arith.constant dense<0.000000e+00> : vector<16xf32>
    %22 = vector.multi_reduction <add>, %21, %cst_16 [1] : vector<16x32xf32> to vector<16xf32>
    %23 = vector.shape_cast %22 : vector<16xf32> to vector<16x1xf32>
    %24 = vector.extract_strided_slice %18 {offsets = [0, 0], sizes = [1, 1], strides = [1, 1]} : vector<1x2xf32> to vector<1x1xf32>
    %25 = vector.broadcast %24 : vector<1x1xf32> to vector<16x1xf32>
    %26 = arith.addf %23, %25 : vector<16x1xf32>
    %27 = arith.negf %26 : vector<16x1xf32>
    %28 = math.exp %27 : vector<16x1xf32>
    %cst_17 = arith.constant 1.000000e+00 : f32
    %29 = vector.broadcast %cst_17 : f32 to vector<16x1xf32>
    %30 = arith.addf %29, %28 : vector<16x1xf32>
    %31 = arith.divf %29, %30 : vector<16x1xf32>
    %32 = vector.extract_strided_slice %17 {offsets = [1, 0], sizes = [1, 32], strides = [1, 1]} : vector<2x32xf32> to vector<1x32xf32>
    %33 = vector.broadcast %32 : vector<1x32xf32> to vector<16x32xf32>
    %34 = arith.mulf %16, %33 : vector<16x32xf32>
    %cst_18 = arith.constant dense<0.000000e+00> : vector<16xf32>
    %35 = vector.multi_reduction <add>, %34, %cst_18 [1] : vector<16x32xf32> to vector<16xf32>
    %36 = vector.shape_cast %35 : vector<16xf32> to vector<16x1xf32>
    %37 = vector.extract_strided_slice %18 {offsets = [0, 1], sizes = [1, 1], strides = [1, 1]} : vector<1x2xf32> to vector<1x1xf32>
    %38 = vector.broadcast %37 : vector<1x1xf32> to vector<16x1xf32>
    %39 = arith.addf %36, %38 : vector<16x1xf32>
    %40 = arith.negf %39 : vector<16x1xf32>
    %41 = math.exp %40 : vector<16x1xf32>
    %cst_19 = arith.constant 1.000000e+00 : f32
    %42 = vector.broadcast %cst_19 : f32 to vector<16x1xf32>
    %43 = arith.addf %42, %41 : vector<16x1xf32>
    %44 = arith.divf %42, %43 : vector<16x1xf32>
    %c0_20 = arith.constant 0 : index
    %c0_21 = arith.constant 0 : index
    %45 = vector.load %arg8[%c0_20, %c0_21] : memref<2x32xf32, #tpu.memory_space<vmem>>, vector<2x32xf32>
    %46 = vector.extract_strided_slice %45 {offsets = [0, 0], sizes = [1, 32], strides = [1, 1]} : vector<2x32xf32> to vector<1x32xf32>
    %47 = vector.broadcast %31 : vector<16x1xf32> to vector<16x32xf32>
    %48 = vector.broadcast %46 : vector<1x32xf32> to vector<16x32xf32>
    %49 = arith.mulf %47, %48 : vector<16x32xf32>
    %50 = vector.extract_strided_slice %45 {offsets = [1, 0], sizes = [1, 32], strides = [1, 1]} : vector<2x32xf32> to vector<1x32xf32>
    %51 = vector.broadcast %44 : vector<16x1xf32> to vector<16x32xf32>
    %52 = vector.broadcast %50 : vector<1x32xf32> to vector<16x32xf32>
    %53 = arith.mulf %51, %52 : vector<16x32xf32>
    %54 = arith.addf %49, %53 : vector<16x32xf32>
    %c0_22 = arith.constant 0 : index
    %c0_23 = arith.constant 0 : index
    %55 = vector.load %arg9[%c0_22, %c0_23] : memref<1x32xf32, #tpu.memory_space<vmem>>, vector<1x32xf32>
    %56 = vector.broadcast %55 : vector<1x32xf32> to vector<16x32xf32>
    %57 = arith.addf %54, %56 : vector<16x32xf32>
    %cst_24 = arith.constant 0.000000e+00 : f32
    %58 = vector.broadcast %cst_24 : f32 to vector<16x32xf32>
    %59 = arith.maximumf %57, %58 : vector<16x32xf32>
    %60 = arith.truncf %59 : vector<16x32xf32> to vector<16x32xbf16>
    %c0_25 = arith.constant 0 : index
    %c0_26 = arith.constant 0 : index
    %61 = vector.load %arg10[%c0_25, %c0_26] : memref<32x64xbf16, #tpu.memory_space<vmem>>, vector<32x64xbf16>
    %cst_27 = arith.constant dense<0.000000e+00> : vector<16x64xf32>
    %62 = tpu.matmul %60, %61, %cst_27 {dimension_numbers = #tpu.dot_dimension_numbers<[1], [0], [0], [1], [0, 0, 1, 1], [], []>} : vector<16x32xbf16>, vector<32x64xbf16>, vector<16x64xf32> -> vector<16x64xf32>
    %c0_28 = arith.constant 0 : index
    %c0_29 = arith.constant 0 : index
    %63 = vector.load %arg11[%c0_28, %c0_29] : memref<1x64xf32, #tpu.memory_space<vmem>>, vector<1x64xf32>
    %64 = vector.broadcast %63 : vector<1x64xf32> to vector<16x64xf32>
    %65 = arith.addf %62, %64 : vector<16x64xf32>
    %cst_30 = arith.constant 0.000000e+00 : f32
    %66 = vector.broadcast %cst_30 : f32 to vector<16x64xf32>
    %67 = arith.maximumf %65, %66 : vector<16x64xf32>
    %68 = arith.truncf %67 : vector<16x64xf32> to vector<16x64xbf16>
    %c0_31 = arith.constant 0 : index
    %c0_32 = arith.constant 0 : index
    %69 = vector.load %arg12[%c0_31, %c0_32] : memref<64x64xbf16, #tpu.memory_space<vmem>>, vector<64x64xbf16>
    %cst_33 = arith.constant dense<0.000000e+00> : vector<16x64xf32>
    %70 = tpu.matmul %68, %69, %cst_33 {dimension_numbers = #tpu.dot_dimension_numbers<[1], [0], [0], [1], [0, 0, 1, 1], [], []>} : vector<16x64xbf16>, vector<64x64xbf16>, vector<16x64xf32> -> vector<16x64xf32>
    %c0_34 = arith.constant 0 : index
    %c0_35 = arith.constant 0 : index
    %71 = vector.load %arg13[%c0_34, %c0_35] : memref<1x64xf32, #tpu.memory_space<vmem>>, vector<1x64xf32>
    %72 = vector.broadcast %71 : vector<1x64xf32> to vector<16x64xf32>
    %73 = arith.addf %70, %72 : vector<16x64xf32>
    %74 = arith.truncf %73 : vector<16x64xf32> to vector<16x64xbf16>
    %c0_36 = arith.constant 0 : index
    %c0_37 = arith.constant 0 : index
    %75 = vector.load %arg14[%c0_36, %c0_37] : memref<16x64xbf16, #tpu.memory_space<vmem>>, vector<16x64xbf16>
    tpu.vector_store %arg14[%c0_36, %c0_37], %74 {strides = array<i32>} : memref<16x64xbf16, #tpu.memory_space<vmem>>, vector<16x64xbf16>,
    return
  }
  func.func @transform_0(%arg0: i32) -> (i32, i32) {
    %c0_i32 = arith.constant 0 : i32
    %c0_i32_0 = arith.constant 0 : i32
    return %arg0, %c0_i32 : i32, i32
  }
  func.func @transform_1(%arg0: i32) -> (i32, i32) {
    %c0_i32 = arith.constant 0 : i32
    %c0_i32_0 = arith.constant 0 : i32
    %c0_i32_1 = arith.constant 0 : i32
    return %c0_i32, %c0_i32_0 : i32, i32
  }
  func.func @transform_2(%arg0: i32) -> (i32, i32) {
    %c0_i32 = arith.constant 0 : i32
    %c0_i32_0 = arith.constant 0 : i32
    %c0_i32_1 = arith.constant 0 : i32
    return %c0_i32, %c0_i32_0 : i32, i32
  }
  func.func @transform_3(%arg0: i32) -> (i32, i32) {
    %c0_i32 = arith.constant 0 : i32
    %c0_i32_0 = arith.constant 0 : i32
    %c0_i32_1 = arith.constant 0 : i32
    return %c0_i32, %c0_i32_0 : i32, i32
  }
  func.func @transform_4(%arg0: i32) -> (i32, i32) {
    %c0_i32 = arith.constant 0 : i32
    %c0_i32_0 = arith.constant 0 : i32
    %c0_i32_1 = arith.constant 0 : i32
    return %c0_i32, %c0_i32_0 : i32, i32
  }
  func.func @transform_5(%arg0: i32) -> (i32, i32) {
    %c0_i32 = arith.constant 0 : i32
    %c0_i32_0 = arith.constant 0 : i32
    %c0_i32_1 = arith.constant 0 : i32
    return %c0_i32, %c0_i32_0 : i32, i32
  }
  func.func @transform_6(%arg0: i32) -> (i32, i32) {
    %c0_i32 = arith.constant 0 : i32
    %c0_i32_0 = arith.constant 0 : i32
    %c0_i32_1 = arith.constant 0 : i32
    return %c0_i32, %c0_i32_0 : i32, i32
  }
  func.func @transform_7(%arg0: i32) -> (i32, i32) {
    %c0_i32 = arith.constant 0 : i32
    %c0_i32_0 = arith.constant 0 : i32
    %c0_i32_1 = arith.constant 0 : i32
    return %c0_i32, %c0_i32_0 : i32, i32
  }
  func.func @transform_8(%arg0: i32) -> (i32, i32) {
    %c0_i32 = arith.constant 0 : i32
    %c0_i32_0 = arith.constant 0 : i32
    %c0_i32_1 = arith.constant 0 : i32
    return %c0_i32, %c0_i32_0 : i32, i32
  }
  func.func @transform_9(%arg0: i32) -> (i32, i32) {
    %c0_i32 = arith.constant 0 : i32
    %c0_i32_0 = arith.constant 0 : i32
    %c0_i32_1 = arith.constant 0 : i32
    return %c0_i32, %c0_i32_0 : i32, i32
  }
  func.func @transform_10(%arg0: i32) -> (i32, i32) {
    %c0_i32 = arith.constant 0 : i32
    %c0_i32_0 = arith.constant 0 : i32
    %c0_i32_1 = arith.constant 0 : i32
    return %c0_i32, %c0_i32_0 : i32, i32
  }
  func.func @transform_11(%arg0: i32) -> (i32, i32) {
    %c0_i32 = arith.constant 0 : i32
    %c0_i32_0 = arith.constant 0 : i32
    %c0_i32_1 = arith.constant 0 : i32
    return %c0_i32, %c0_i32_0 : i32, i32
  }
  func.func @transform_12(%arg0: i32) -> (i32, i32) {
    %c0_i32 = arith.constant 0 : i32
    %c0_i32_0 = arith.constant 0 : i32
    %c0_i32_1 = arith.constant 0 : i32
    return %c0_i32, %c0_i32_0 : i32, i32
  }
  func.func @transform_13(%arg0: i32) -> (i32, i32) {
    %c0_i32 = arith.constant 0 : i32
    %c0_i32_0 = arith.constant 0 : i32
    return %arg0, %c0_i32 : i32, i32
  }
}

</mosaic_0001>

<llo_original>
// kernel: tpu_custom_call.1
$region0: #{tpu_custom_call.1}
  #allocation0 [shape = 'u32[]', space=smem, size = 0x4, offset = 0x4, fixed_abs, tag = 'smem constant byte address 0x4 - core index']
  #allocation1 [shape = 'u32[144,128]{1,0:T(1,128)}', space=vmem, size = 0x12000, scoped, tag = 'internal scratch']
  %s0 = inlined_call_operand.hbm [shape: f32[16,64], index: 0, kind: input, shape index: {}]
  %s1 = inlined_call_operand.vmem [shape: bf16[64,64], index: 1, kind: input, shape index: {}]
  %s2 = inlined_call_operand.hbm [shape: f32[1,64], index: 2, kind: input, shape index: {}]
  %s3 = inlined_call_operand.vmem [shape: bf16[64,32], index: 3, kind: input, shape index: {}]
  %s4 = inlined_call_operand.hbm [shape: f32[1,32], index: 4, kind: input, shape index: {}]
  %s5 = inlined_call_operand.vmem [shape: f32[2,32], index: 5, kind: input, shape index: {}]
  %s6 = inlined_call_operand.hbm [shape: f32[1,2], index: 6, kind: input, shape index: {}]
  %s7 = inlined_call_operand.hbm [shape: f32[2,32], index: 7, kind: input, shape index: {}]
  %s8 = inlined_call_operand.hbm [shape: f32[1,32], index: 8, kind: input, shape index: {}]
  %s9 = inlined_call_operand.vmem [shape: bf16[32,64], index: 9, kind: input, shape index: {}]
  %s10 = inlined_call_operand.vmem [shape: f32[1,64], index: 10, kind: input, shape index: {}]
  %s11 = inlined_call_operand.vmem [shape: bf16[64,64], index: 11, kind: input, shape index: {}]
  %s12 = inlined_call_operand.vmem [shape: f32[1,64], index: 12, kind: input, shape index: {}]
  %s13 = inlined_call_operand.hbm [shape: bf16[16,64], index: 13, kind: output, shape index: {}]
  %s14 = sld [smem:[#allocation0]]
  $region86: #{tpu_custom_call.1} parent=0
    _
  %s16 = ssub.s32 1, %s14
  %s17 = scalar_select 0, %s16, %s14
  $region1: #{tpu_custom_call.1} parent=0
    #allocation2 [shape = 'u8[8192]{0}', space=vmem, size = 0x2000, scoped, tag = 'input window, operand 0, single buffered']
    #allocation3 [shape = 's32[1]{0}', space=sflag, size = 0x4, scoped, tag = 'scoped memory for tpu_custom_call.1']
    #allocation4 [shape = 's32[1]{0}', space=sflag, size = 0x4, scoped, tag = 'scoped memory for tpu_custom_call.1']
    #allocation5 [shape = 'u8[512]{0}', space=vmem, size = 0x400, scoped, tag = 'input window, operand 2, single buffered']
    #allocation6 [shape = 's32[1]{0}', space=sflag, size = 0x4, scoped, tag = 'scoped memory for tpu_custom_call.1']
    #allocation7 [shape = 'u8[512]{0}', space=vmem, size = 0x400, scoped, tag = 'input window, operand 4, single buffered']
    #allocation8 [shape = 'u8[512]{0}', space=vmem, size = 0x400, scoped, tag = 'input window, operand 6, single buffered']
    #allocation9 [shape = 's32[1]{0}', space=sflag, size = 0x4, scoped, tag = 'scoped memory for tpu_custom_call.1']
    #allocation10 [shape = 'u8[1024]{0}', space=vmem, size = 0x400, scoped, tag = 'input window, operand 7, single buffered']
    #allocation11 [shape = 'u8[512]{0}', space=vmem, size = 0x400, scoped, tag = 'input window, operand 8, single buffered']
    #allocation12 [shape = 's32[1]{0}', space=sflag, size = 0x4, scoped, tag = 'scoped memory for tpu_custom_call.1']
    #allocation13 [shape = 'u8[4096]{0}', space=vmem, size = 0x1000, scoped, tag = 'output window, operand 0, single buffered']
    %18 = vsyncpa [#allocation3], 0
    %19 = vsyncpa [#allocation6], 0
    %20 = vsyncpa [#allocation9], 0
    %21 = vsyncpa [#allocation12], 0
    %22 = vsyncpa [#allocation4], 0
    // Predicated region
    $region2: #{tpu_custom_call.1} parent=1 // pred_check
      _
    $region3: #{tpu_custom_call.1} parent=1 // pred_check_branch
      %24 = sbr.rel (0) target = $region5
    $region4: #{tpu_custom_call.1} parent=1 // pred_region
      %s26 = ssub.s32 256, 256
      %27 = vsyncadd [#allocation3], %s26
      %s28 = sshll.u32 [#allocation2], 4
      %s29 = int_to_ptr.vmem [resolvable:$true] %s28
      %34 = dma.hbm_to_vmem [thread:$0]  %s0, 256, %s29, [#allocation3], 128, 128, 8
    $region5: #{tpu_custom_call.1} parent=1 // pred_fallthru
      _
    // Predicated region
    $region6: #{tpu_custom_call.1} parent=1 // pred_check
      _
    $region7: #{tpu_custom_call.1} parent=1 // pred_check_branch
      %36 = sbr.rel (0) target = $region9
    $region8: #{tpu_custom_call.1} parent=1 // pred_region
      _
    $region9: #{tpu_custom_call.1} parent=1 // pred_fallthru
      _
    // Predicated region
    $region10: #{tpu_custom_call.1} parent=1 // pred_check
      _
    $region11: #{tpu_custom_call.1} parent=1 // pred_check_branch
      %38 = sbr.rel (0) target = $region13
    $region12: #{tpu_custom_call.1} parent=1 // pred_region
      %s40 = ssub.s32 16, 16
      %41 = vsyncadd [#allocation6], %s40
      %s43 = sshll.u32 [#allocation5], 4
      %s44 = int_to_ptr.vmem [resolvable:$true] %s43
      %46 = dma.hbm_to_vmem [thread:$0]  %s2, 16, %s44, [#allocation6]
    $region13: #{tpu_custom_call.1} parent=1 // pred_fallthru
      _
    // Predicated region
    $region14: #{tpu_custom_call.1} parent=1 // pred_check
      _
    $region15: #{tpu_custom_call.1} parent=1 // pred_check_branch
      %48 = sbr.rel (0) target = $region17
    $region16: #{tpu_custom_call.1} parent=1 // pred_region
      _
    $region17: #{tpu_custom_call.1} parent=1 // pred_fallthru
      _
    // Predicated region
    $region18: #{tpu_custom_call.1} parent=1 // pred_check
      _
    $region19: #{tpu_custom_call.1} parent=1 // pred_check_branch
      %50 = sbr.rel (0) target = $region21
    $region20: #{tpu_custom_call.1} parent=1 // pred_region
      %s52 = ssub.s32 16, 16
      %53 = vsyncadd [#allocation6], %s52
      %s55 = sshll.u32 [#allocation7], 4
      %s56 = int_to_ptr.vmem [resolvable:$true] %s55
      %58 = dma.hbm_to_vmem [thread:$0]  %s4, 16, %s56, [#allocation6]
    $region21: #{tpu_custom_call.1} parent=1 // pred_fallthru
      _
    // Predicated region
    $region22: #{tpu_custom_call.1} parent=1 // pred_check
      _
    $region23: #{tpu_custom_call.1} parent=1 // pred_check_branch
      %60 = sbr.rel (0) target = $region25
    $region24: #{tpu_custom_call.1} parent=1 // pred_region
      _
    $region25: #{tpu_custom_call.1} parent=1 // pred_fallthru
      _
    // Predicated region
    $region26: #{tpu_custom_call.1} parent=1 // pred_check
      _
    $region27: #{tpu_custom_call.1} parent=1 // pred_check_branch
      %62 = sbr.rel (0) target = $region29
    $region28: #{tpu_custom_call.1} parent=1 // pred_region
      %s64 = ssub.s32 16, 16
      %65 = vsyncadd [#allocation9], %s64
      %s67 = sshll.u32 [#allocation8], 4
      %s68 = int_to_ptr.vmem [resolvable:$true] %s67
      %70 = dma.hbm_to_vmem [thread:$0]  %s6, 16, %s68, [#allocation9]
    $region29: #{tpu_custom_call.1} parent=1 // pred_fallthru
      _
    // Predicated region
    $region30: #{tpu_custom_call.1} parent=1 // pred_check
      _
    $region31: #{tpu_custom_call.1} parent=1 // pred_check_branch
      %72 = sbr.rel (0) target = $region33
    $region32: #{tpu_custom_call.1} parent=1 // pred_region
      %s74 = ssub.s32 32, 32
      %75 = vsyncadd [#allocation9], %s74
      %s77 = sshll.u32 [#allocation10], 4
      %s78 = int_to_ptr.vmem [resolvable:$true] %s77
      %80 = dma.hbm_to_vmem [thread:$0]  %s7, 32, %s78, [#allocation9]
    $region33: #{tpu_custom_call.1} parent=1 // pred_fallthru
      _
    // Predicated region
    $region34: #{tpu_custom_call.1} parent=1 // pred_check
      _
    $region35: #{tpu_custom_call.1} parent=1 // pred_check_branch
      %82 = sbr.rel (0) target = $region37
    $region36: #{tpu_custom_call.1} parent=1 // pred_region
      %s84 = ssub.s32 16, 16
      %85 = vsyncadd [#allocation12], %s84
      %s87 = sshll.u32 [#allocation11], 4
      %s88 = int_to_ptr.vmem [resolvable:$true] %s87
      %90 = dma.hbm_to_vmem [thread:$0]  %s8, 16, %s88, [#allocation12]
    $region37: #{tpu_custom_call.1} parent=1 // pred_fallthru
      _
    // Predicated region
    $region38: #{tpu_custom_call.1} parent=1 // pred_check
      _
    $region39: #{tpu_custom_call.1} parent=1 // pred_check_branch
      %92 = sbr.rel (0) target = $region41
    $region40: #{tpu_custom_call.1} parent=1 // pred_region
      _
    $region41: #{tpu_custom_call.1} parent=1 // pred_fallthru
      _
    // Predicated region
    $region42: #{tpu_custom_call.1} parent=1 // pred_check
      _
    $region43: #{tpu_custom_call.1} parent=1 // pred_check_branch
      %94 = sbr.rel (0) target = $region45
    $region44: #{tpu_custom_call.1} parent=1 // pred_region
      _
    $region45: #{tpu_custom_call.1} parent=1 // pred_fallthru
      _
    // Predicated region
    $region46: #{tpu_custom_call.1} parent=1 // pred_check
      _
    $region47: #{tpu_custom_call.1} parent=1 // pred_check_branch
      %96 = sbr.rel (0) target = $region49
    $region48: #{tpu_custom_call.1} parent=1 // pred_region
      _
    $region49: #{tpu_custom_call.1} parent=1 // pred_fallthru
      _
    // Predicated region
    $region50: #{tpu_custom_call.1} parent=1 // pred_check
      _
    $region51: #{tpu_custom_call.1} parent=1 // pred_check_branch
      %98 = sbr.rel (0) target = $region53
    $region52: #{tpu_custom_call.1} parent=1 // pred_region
      _
    $region53: #{tpu_custom_call.1} parent=1 // pred_fallthru
      _
    // Predicated region
    $region54: #{tpu_custom_call.1} parent=1 // pred_check
      _
    $region55: #{tpu_custom_call.1} parent=1 // pred_check_branch
      %100 = sbr.rel (0) target = $region57
    $region56: #{tpu_custom_call.1} parent=1 // pred_region
      %101 = dma.done [#allocation3], 256
    $region57: #{tpu_custom_call.1} parent=1 // pred_fallthru
      _
    // Predicated region
    $region58: #{tpu_custom_call.1} parent=1 // pred_check
      _
    $region59: #{tpu_custom_call.1} parent=1 // pred_check_branch
      %103 = sbr.rel (0) target = $region61
    $region60: #{tpu_custom_call.1} parent=1 // pred_region
      %104 = dma.done [#allocation6], 16
    $region61: #{tpu_custom_call.1} parent=1 // pred_fallthru
      _
    // Predicated region
    $region62: #{tpu_custom_call.1} parent=1 // pred_check
      _
    $region63: #{tpu_custom_call.1} parent=1 // pred_check_branch
      %106 = sbr.rel (0) target = $region65
    $region64: #{tpu_custom_call.1} parent=1 // pred_region
      %107 = dma.done [#allocation6], 16
    $region65: #{tpu_custom_call.1} parent=1 // pred_fallthru
      _
    // Predicated region
    $region66: #{tpu_custom_call.1} parent=1 // pred_check
      _
    $region67: #{tpu_custom_call.1} parent=1 // pred_check_branch
      %109 = sbr.rel (0) target = $region69
    $region68: #{tpu_custom_call.1} parent=1 // pred_region
      %110 = dma.done [#allocation9], 16
    $region69: #{tpu_custom_call.1} parent=1 // pred_fallthru
      _
    // Predicated region
    $region70: #{tpu_custom_call.1} parent=1 // pred_check
      _
    $region71: #{tpu_custom_call.1} parent=1 // pred_check_branch
      %112 = sbr.rel (0) target = $region73
    $region72: #{tpu_custom_call.1} parent=1 // pred_region
      %113 = dma.done [#allocation9], 32
    $region73: #{tpu_custom_call.1} parent=1 // pred_fallthru
      _
    // Predicated region
    $region74: #{tpu_custom_call.1} parent=1 // pred_check
      _
    $region75: #{tpu_custom_call.1} parent=1 // pred_check_branch
      %115 = sbr.rel (0) target = $region77
    $region76: #{tpu_custom_call.1} parent=1 // pred_region
      %116 = dma.done [#allocation12], 16
    $region77: #{tpu_custom_call.1} parent=1 // pred_fallthru
      _
    %v118 = vld [vmem:[#allocation2] sm:$0xff]
    %v119 = vld [vmem:[#allocation2 + $0x8] sm:$0xff]
    %v120 = vpack.c.bf16 %v119, %v118
    %v121 = vld [vmem:[%s1] sm:$0xf]
    %v122 = vld [vmem:[%s1 + $0x4] sm:$0xf]
    %v123 = vld [vmem:[%s1 + $0x8] sm:$0xf]
    %v124 = vld [vmem:[%s1 + $0xc] sm:$0xf]
    %v125 = vld [vmem:[%s1 + $0x10] sm:$0xf]
    %v126 = vld [vmem:[%s1 + $0x14] sm:$0xf]
    %v127 = vld [vmem:[%s1 + $0x18] sm:$0xf]
    %v128 = vld [vmem:[%s1 + $0x1c] sm:$0xf]
    %v129 = vld [vmem:[#allocation5] sm:$0x1]
    %v131 = vlaneseq
    %v132 = vshrl.u32 %v131, 7
    %v133 = vsub.s32 0, %v132
    %v134 = vrot.slane %v129, %v133
    %v144 = vunpack.c.l.b16 %v121
    %v145 = vunpack.c.l.b16 %v122
    %v146 = vunpack.c.l.b16 %v123
    %v147 = vunpack.c.l.b16 %v124
    %v148 = vunpack.c.l.b16 %v125
    %v149 = vunpack.c.l.b16 %v126
    %v150 = vunpack.c.l.b16 %v127
    %v151 = vunpack.c.l.b16 %v128
    %v152 = vpack.c.b16 %v145, %v144
    %v153 = vpack.c.b16 %v147, %v146
    %v154 = vpack.c.b16 %v149, %v148
    %v155 = vpack.c.b16 %v151, %v150
    %vm160 = vcmask 523264
    %v162 = vsel %vm160, %v120, 0
    %164 = vmatprep.subr.bf16.mxu0 0
    %165 = vmatpush1.bf16.msra.mxu0 %v152
    %166 = vmatprep.subr.bf16.mxu0 0
    %167 = vmatpush1.bf16.msra.mxu0 %v153
    %168 = vmatprep.subr.bf16.mxu0 0
    %169 = vmatpush1.bf16.msra.mxu0 %v154
    %170 = vmatprep.subr.bf16.mxu0 0
    %171 = vmatpush1.bf16.msra.mxu0 %v155
    %172 = vmatprep.subr.bf16.mxu0 0
    %173 = vmatpush1.bf16.msra.mxu0 0
    %174 = vmatprep.subr.bf16.mxu0 0
    %175 = vmatpush1.bf16.msra.mxu0 0
    %176 = vmatprep.subr.bf16.mxu0 0
    %177 = vmatpush1.bf16.msra.mxu0 0
    %178 = vmatprep.subr.bf16.mxu0 0
    %179 = vmatpush1.bf16.msra.mxu0 0
    %180 = vmatprep.subr.bf16.mxu0 0
    %181 = vmatpush1.bf16.msra.mxu0 0
    %182 = vmatprep.subr.bf16.mxu0 0
    %183 = vmatpush1.bf16.msra.mxu0 0
    %184 = vmatprep.subr.bf16.mxu0 0
    %185 = vmatpush1.bf16.msra.mxu0 0
    %186 = vmatprep.subr.bf16.mxu0 0
    %187 = vmatpush1.bf16.msra.mxu0 0
    %188 = vmatprep.subr.bf16.mxu0 0
    %189 = vmatpush1.bf16.msra.mxu0 0
    %190 = vmatprep.subr.bf16.mxu0 0
    %191 = vmatpush1.bf16.msra.mxu0 0
    %192 = vmatprep.subr.bf16.mxu0 0
    %193 = vmatpush1.bf16.msra.mxu0 0
    %194 = vmatprep.subr.bf16.mxu0 0
    %195 = vmatpush1.bf16.msra.mxu0 0
    %196 = vmatprep.mubr.bf16.mxu0 0
    %197 = vmatmul.mubr.bf16.gmra.mrb[0].mxu0 %v162
    %v198 = vpop.f32.mrb[0].mxu0
    %v199 = vadd.f32 %v134, %v198
    %v200 = vpop.f32.mrb[0].mxu0
    %v201 = vpop.f32.mrb[0].mxu0
    %v202 = vadd.f32 %v134, %v201
    %v203 = vpop.f32.mrb[0].mxu0
    %204 = vdwg.mxu0
    %v205 = vmax.f32 %v199, 0.0
    %v206 = vmax.f32 %v202, 0.0
    %v207 = vpack.c.bf16 %v206, %v205
    %v208 = vld [vmem:[%s3] sm:$0xf]
    %v209 = vld [vmem:[%s3 + $0x4] sm:$0xf]
    %v210 = vld [vmem:[%s3 + $0x8] sm:$0xf]
    %v211 = vld [vmem:[%s3 + $0xc] sm:$0xf]
    %v212 = vld [vmem:[%s3 + $0x10] sm:$0xf]
    %v213 = vld [vmem:[%s3 + $0x14] sm:$0xf]
    %v214 = vld [vmem:[%s3 + $0x18] sm:$0xf]
    %v215 = vld [vmem:[%s3 + $0x1c] sm:$0xf]
    %v216 = vld [vmem:[#allocation7] sm:$0x1]
    %v218 = vlaneseq
    %v219 = vshrl.u32 %v218, 7
    %v220 = vsub.s32 0, %v219
    %v221 = vrot.slane %v216, %v220
    %v231 = vunpack.c.l.b16 %v208
    %v232 = vunpack.c.l.b16 %v209
    %v233 = vunpack.c.l.b16 %v210
    %v234 = vunpack.c.l.b16 %v211
    %v235 = vunpack.c.l.b16 %v212
    %v236 = vunpack.c.l.b16 %v213
    %v237 = vunpack.c.l.b16 %v214
    %v238 = vunpack.c.l.b16 %v215
    %v239 = vpack.c.b16 %v232, %v231
    %v240 = vpack.c.b16 %v234, %v233
    %v241 = vpack.c.b16 %v236, %v235
    %v242 = vpack.c.b16 %v238, %v237
    %v248 = vsel %vm160, %v207, 0
    %250 = vmatprep.subr.bf16.mxu0 0
    %251 = vmatpush1.bf16.msra.mxu0 %v239
    %252 = vmatprep.subr.bf16.mxu0 0
    %253 = vmatpush1.bf16.msra.mxu0 %v240
    %254 = vmatprep.subr.bf16.mxu0 0
    %255 = vmatpush1.bf16.msra.mxu0 %v241
    %256 = vmatprep.subr.bf16.mxu0 0
    %257 = vmatpush1.bf16.msra.mxu0 %v242
    %258 = vmatprep.subr.bf16.mxu0 0
    %259 = vmatpush1.bf16.msra.mxu0 0
    %260 = vmatprep.subr.bf16.mxu0 0
    %261 = vmatpush1.bf16.msra.mxu0 0
    %262 = vmatprep.subr.bf16.mxu0 0
    %263 = vmatpush1.bf16.msra.mxu0 0
    %264 = vmatprep.subr.bf16.mxu0 0
    %265 = vmatpush1.bf16.msra.mxu0 0
    %266 = vmatprep.subr.bf16.mxu0 0
    %267 = vmatpush1.bf16.msra.mxu0 0
    %268 = vmatprep.subr.bf16.mxu0 0
    %269 = vmatpush1.bf16.msra.mxu0 0
    %270 = vmatprep.subr.bf16.mxu0 0
    %271 = vmatpush1.bf16.msra.mxu0 0
    %272 = vmatprep.subr.bf16.mxu0 0
    %273 = vmatpush1.bf16.msra.mxu0 0
    %274 = vmatprep.subr.bf16.mxu0 0
    %275 = vmatpush1.bf16.msra.mxu0 0
    %276 = vmatprep.subr.bf16.mxu0 0
    %277 = vmatpush1.bf16.msra.mxu0 0
    %278 = vmatprep.subr.bf16.mxu0 0
    %279 = vmatpush1.bf16.msra.mxu0 0
    %280 = vmatprep.subr.bf16.mxu0 0
    %281 = vmatpush1.bf16.msra.mxu0 0
    %282 = vmatprep.mubr.bf16.mxu0 0
    %283 = vmatmul.mubr.bf16.gmra.mrb[0].mxu0 %v248
    %v284 = vpop.f32.mrb[0].mxu0
    %v285 = vadd.f32 %v221, %v284
    %v286 = vpop.f32.mrb[0].mxu0
    %v287 = vpop.f32.mrb[0].mxu0
    %v288 = vadd.f32 %v221, %v287
    %v289 = vpop.f32.mrb[0].mxu0
    %290 = vdwg.mxu0
    %v291 = vmax.f32 %v285, 0.0
    %v292 = vmax.f32 %v288, 0.0
    %v293 = vld [vmem:[%s5] sm:$0x3]
    %v294 = vld [vmem:[#allocation8] sm:$0x1]
    %v295 = vlaneseq
    %v296 = vshrl.u32 %v295, 7
    %v297 = vsub.s32 0, %v296
    %v298 = vrot.slane %v293, %v297
    %v299 = vmul.f32 %v291, %v298
    %v300 = vmul.f32 %v292, %v298
    %vm301 = vcmask 261120
    %v302 = vsel %vm301, %v299, 0.0
    %303 = vadd.xlane.f32.xlu0 %v302
    %v304 = vpop.xlane.xlu0 %303
    %v305 = vsel %vm301, %v300, 0.0
    %306 = vadd.xlane.f32.xlu0 %v305
    %v307 = vpop.xlane.xlu0 %306
    %v309 = vlaneseq
    %v310 = vshrl.u32 %v309, 7
    %v311 = vsub.s32 0, %v310
    %v312 = vrot.slane %v294, %v311
    %v314 = vadd.f32 %v304, %v312
    %v315 = vadd.f32 %v307, %v312
    %v316 = vxor.u32 %v314, 2147483648
    %v317 = vxor.u32 %v315, 2147483648
    %v318 = vmul.f32 %v316, 1.442695
    %v319 = vpow.pop %v318
    %v320 = vmul.f32 %v317, 1.442695
    %v321 = vpow.pop %v320
    %v322 = vadd.f32 %v319, 1.0
    %v323 = vadd.f32 %v321, 1.0
    %v324 = vrcp.pop %v322
    %v325 = vmul.f32 1.0, %v324
    %v326 = vrcp.pop %v323
    %v327 = vmul.f32 1.0, %v326
    %v328 = vlaneseq
    %v329 = vshrl.u32 %v328, 7
    %v330 = vsub.s32 1, %v329
    %v331 = vrot.slane %v293, %v330
    %v332 = vmul.f32 %v291, %v331
    %v333 = vmul.f32 %v292, %v331
    %v334 = vsel %vm301, %v332, 0.0
    %335 = vadd.xlane.f32.xlu0 %v334
    %v336 = vpop.xlane.xlu0 %335
    %v337 = vsel %vm301, %v333, 0.0
    %338 = vadd.xlane.f32.xlu0 %v337
    %v339 = vpop.xlane.xlu0 %338
    %v340 = vadd.f32 %v336, %v312
    %v341 = vadd.f32 %v339, %v312
    %v342 = vxor.u32 %v340, 2147483648
    %v343 = vxor.u32 %v341, 2147483648
    %v344 = vmul.f32 %v342, 1.442695
    %v345 = vpow.pop %v344
    %v346 = vmul.f32 %v343, 1.442695
    %v347 = vpow.pop %v346
    %v348 = vadd.f32 %v345, 1.0
    %v349 = vadd.f32 %v347, 1.0
    %v350 = vrcp.pop %v348
    %v351 = vmul.f32 1.0, %v350
    %v352 = vrcp.pop %v349
    %v353 = vmul.f32 1.0, %v352
    %v354 = vld [vmem:[#allocation10] sm:$0x3]
    %356 = vset.pattern.permute.xlu0 0
    %357 = vperm.xlu0 %356, %v325
    %v358 = vpop.permute.xlu0 %357
    %361 = vset.pattern.permute.xlu0 0
    %362 = vperm.xlu0 %361, %v327
    %v363 = vpop.permute.xlu0 %362
    %v365 = vlaneseq
    %v366 = vshrl.u32 %v365, 7
    %v367 = vsub.s32 0, %v366
    %v368 = vrot.slane %v354, %v367
    %v369 = vmul.f32 %v358, %v368
    %v370 = vmul.f32 %v363, %v368
    %372 = vset.pattern.permute.xlu0 1
    %373 = vperm.xlu0 %372, %v351
    %v374 = vpop.permute.xlu0 %373
    %377 = vset.pattern.permute.xlu0 1
    %378 = vperm.xlu0 %377, %v353
    %v379 = vpop.permute.xlu0 %378
    %v381 = vlaneseq
    %v382 = vshrl.u32 %v381, 7
    %v383 = vsub.s32 1, %v382
    %v384 = vrot.slane %v354, %v383
    %v385 = vmul.f32 %v374, %v384
    %v386 = vmul.f32 %v379, %v384
    %v387 = vadd.f32 %v369, %v385
    %v388 = vadd.f32 %v370, %v386
    %v389 = vld [vmem:[#allocation11] sm:$0x1]
    %v391 = vlaneseq
    %v392 = vshrl.u32 %v391, 7
    %v393 = vsub.s32 0, %v392
    %v394 = vrot.slane %v389, %v393
    %v396 = vadd.f32 %v387, %v394
    %v397 = vadd.f32 %v388, %v394
    %v398 = vmax.f32 %v396, 0.0
    %v399 = vmax.f32 %v397, 0.0
    %v400 = vpack.c.bf16 %v399, %v398
    %v401 = vld [vmem:[%s9] sm:$0xf]
    %v402 = vld [vmem:[%s9 + $0x4] sm:$0xf]
    %v403 = vld [vmem:[%s9 + $0x8] sm:$0xf]
    %v404 = vld [vmem:[%s9 + $0xc] sm:$0xf]
    %v405 = vld [vmem:[%s10] sm:$0x1]
    %v407 = vlaneseq
    %v408 = vshrl.u32 %v407, 7
    %v409 = vsub.s32 0, %v408
    %v410 = vrot.slane %v405, %v409
    %v416 = vunpack.c.l.b16 %v401
    %v417 = vunpack.c.l.b16 %v402
    %v418 = vunpack.c.l.b16 %v403
    %v419 = vunpack.c.l.b16 %v404
    %v420 = vpack.c.b16 %v417, %v416
    %v421 = vpack.c.b16 %v419, %v418
    %v425 = vsel %vm301, %v400, 0
    %427 = vmatprep.subr.bf16.mxu0 0
    %428 = vmatpush1.bf16.msra.mxu0 %v420
    %429 = vmatprep.subr.bf16.mxu0 0
    %430 = vmatpush1.bf16.msra.mxu0 %v421
    %431 = vmatprep.subr.bf16.mxu0 0
    %432 = vmatpush1.bf16.msra.mxu0 0
    %433 = vmatprep.subr.bf16.mxu0 0
    %434 = vmatpush1.bf16.msra.mxu0 0
    %435 = vmatprep.subr.bf16.mxu0 0
    %436 = vmatpush1.bf16.msra.mxu0 0
    %437 = vmatprep.subr.bf16.mxu0 0
    %438 = vmatpush1.bf16.msra.mxu0 0
    %439 = vmatprep.subr.bf16.mxu0 0
    %440 = vmatpush1.bf16.msra.mxu0 0
    %441 = vmatprep.subr.bf16.mxu0 0
    %442 = vmatpush1.bf16.msra.mxu0 0
    %443 = vmatprep.subr.bf16.mxu0 0
    %444 = vmatpush1.bf16.msra.mxu0 0
    %445 = vmatprep.subr.bf16.mxu0 0
    %446 = vmatpush1.bf16.msra.mxu0 0
    %447 = vmatprep.subr.bf16.mxu0 0
    %448 = vmatpush1.bf16.msra.mxu0 0
    %449 = vmatprep.subr.bf16.mxu0 0
    %450 = vmatpush1.bf16.msra.mxu0 0
    %451 = vmatprep.subr.bf16.mxu0 0
    %452 = vmatpush1.bf16.msra.mxu0 0
    %453 = vmatprep.subr.bf16.mxu0 0
    %454 = vmatpush1.bf16.msra.mxu0 0
    %455 = vmatprep.subr.bf16.mxu0 0
    %456 = vmatpush1.bf16.msra.mxu0 0
    %457 = vmatprep.subr.bf16.mxu0 0
    %458 = vmatpush1.bf16.msra.mxu0 0
    %459 = vmatprep.mubr.bf16.mxu0 0
    %460 = vmatmul.mubr.bf16.gmra.mrb[0].mxu0 %v425
    %v461 = vpop.f32.mrb[0].mxu0
    %v462 = vadd.f32 %v410, %v461
    %v463 = vpop.f32.mrb[0].mxu0
    %v464 = vpop.f32.mrb[0].mxu0
    %v465 = vadd.f32 %v410, %v464
    %v466 = vpop.f32.mrb[0].mxu0
    %467 = vdwg.mxu0
    %v468 = vmax.f32 %v462, 0.0
    %v469 = vmax.f32 %v465, 0.0
    %v470 = vpack.c.bf16 %v469, %v468
    %v471 = vld [vmem:[%s11] sm:$0xf]
    %v472 = vld [vmem:[%s11 + $0x4] sm:$0xf]
    %v473 = vld [vmem:[%s11 + $0x8] sm:$0xf]
    %v474 = vld [vmem:[%s11 + $0xc] sm:$0xf]
    %v475 = vld [vmem:[%s11 + $0x10] sm:$0xf]
    %v476 = vld [vmem:[%s11 + $0x14] sm:$0xf]
    %v477 = vld [vmem:[%s11 + $0x18] sm:$0xf]
    %v478 = vld [vmem:[%s11 + $0x1c] sm:$0xf]
    %v479 = vld [vmem:[%s12] sm:$0x1]
    %v481 = vlaneseq
    %v482 = vshrl.u32 %v481, 7
    %v483 = vsub.s32 0, %v482
    %v484 = vrot.slane %v479, %v483
    %v494 = vunpack.c.l.b16 %v471
    %v495 = vunpack.c.l.b16 %v472
    %v496 = vunpack.c.l.b16 %v473
    %v497 = vunpack.c.l.b16 %v474
    %v498 = vunpack.c.l.b16 %v475
    %v499 = vunpack.c.l.b16 %v476
    %v500 = vunpack.c.l.b16 %v477
    %v501 = vunpack.c.l.b16 %v478
    %v502 = vpack.c.b16 %v495, %v494
    %v503 = vpack.c.b16 %v497, %v496
    %v504 = vpack.c.b16 %v499, %v498
    %v505 = vpack.c.b16 %v501, %v500
    %v511 = vsel %vm160, %v470, 0
    %513 = vmatprep.subr.bf16.mxu0 0
    %514 = vmatpush1.bf16.msra.mxu0 %v502
    %515 = vmatprep.subr.bf16.mxu0 0
    %516 = vmatpush1.bf16.msra.mxu0 %v503
    %517 = vmatprep.subr.bf16.mxu0 0
    %518 = vmatpush1.bf16.msra.mxu0 %v504
    %519 = vmatprep.subr.bf16.mxu0 0
    %520 = vmatpush1.bf16.msra.mxu0 %v505
    %521 = vmatprep.subr.bf16.mxu0 0
    %522 = vmatpush1.bf16.msra.mxu0 0
    %523 = vmatprep.subr.bf16.mxu0 0
    %524 = vmatpush1.bf16.msra.mxu0 0
    %525 = vmatprep.subr.bf16.mxu0 0
    %526 = vmatpush1.bf16.msra.mxu0 0
    %527 = vmatprep.subr.bf16.mxu0 0
    %528 = vmatpush1.bf16.msra.mxu0 0
    %529 = vmatprep.subr.bf16.mxu0 0
    %530 = vmatpush1.bf16.msra.mxu0 0
    %531 = vmatprep.subr.bf16.mxu0 0
    %532 = vmatpush1.bf16.msra.mxu0 0
    %533 = vmatprep.subr.bf16.mxu0 0
    %534 = vmatpush1.bf16.msra.mxu0 0
    %535 = vmatprep.subr.bf16.mxu0 0
    %536 = vmatpush1.bf16.msra.mxu0 0
    %537 = vmatprep.subr.bf16.mxu0 0
    %538 = vmatpush1.bf16.msra.mxu0 0
    %539 = vmatprep.subr.bf16.mxu0 0
    %540 = vmatpush1.bf16.msra.mxu0 0
    %541 = vmatprep.subr.bf16.mxu0 0
    %542 = vmatpush1.bf16.msra.mxu0 0
    %543 = vmatprep.subr.bf16.mxu0 0
    %544 = vmatpush1.bf16.msra.mxu0 0
    %545 = vmatprep.mubr.bf16.mxu0 0
    %546 = vmatmul.mubr.bf16.gmra.mrb[0].mxu0 %v511
    %v547 = vpop.f32.mrb[0].mxu0
    %v548 = vadd.f32 %v484, %v547
    %v549 = vpop.f32.mrb[0].mxu0
    %v550 = vpop.f32.mrb[0].mxu0
    %v551 = vadd.f32 %v484, %v550
    %v552 = vpop.f32.mrb[0].mxu0
    %553 = vdwg.mxu0
    %v554 = vpack.c.bf16 %v551, %v548
    %v556 = vunpack.c.l.b16 %v554
    %v557 = vunpack.c.h.b16 %v554
    %v558 = vpack.c.b16 %v556, %v556
    %v559 = vpack.c.b16 %v557, %v557
    %vm562 = vcmask 519168
    %563 = vst.msk [vmem:[#allocation13] sm:$0xf] %vm562, %v558
    %564 = vst.msk [vmem:[#allocation13 + $0x4] sm:$0xf] %vm562, %v559
    // Predicated region
    $region78: #{tpu_custom_call.1} parent=1 // pred_check
      _
    $region79: #{tpu_custom_call.1} parent=1 // pred_check_branch
      %566 = sbr.rel (0) target = $region81
    $region80: #{tpu_custom_call.1} parent=1 // pred_region
      %s568 = ssub.s32 128, 128
      %569 = vsyncadd [#allocation4], %s568
      %s570 = sshll.u32 [#allocation13], 4
      %s571 = int_to_ptr.vmem [resolvable:$true] %s570
      %576 = dma.vmem_to_hbm [thread:$0]  %s571, 128, %s13, [#allocation4], 64, 64, 4
    $region81: #{tpu_custom_call.1} parent=1 // pred_fallthru
      _
    // Predicated region
    $region82: #{tpu_custom_call.1} parent=1 // pred_check
      _
    $region83: #{tpu_custom_call.1} parent=1 // pred_check_branch
      %578 = sbr.rel (0) target = $region85
    $region84: #{tpu_custom_call.1} parent=1 // pred_region
      %579 = dma.done [#allocation4], 128
    $region85: #{tpu_custom_call.1} parent=1 // pred_fallthru
      _
    %580 = vsyncpa [#allocation3], 1
    %581 = vsyncpa [#allocation6], 1
    %582 = vsyncpa [#allocation9], 1
    %583 = vsyncpa [#allocation12], 1
    %584 = vsyncpa [#allocation4], 1

</llo_original>
